<compile_context>
chip_gen: v7x
topology: tpu7x:2x2x1
jax: 0.10.0
libtpu: 0.0.40
codegen_flags: <defaults>
</compile_context>

<pallas_src>
import functools

import jax
import jax.numpy as jnp
from jax import lax
from jax.experimental import pallas as pl
from jax.experimental.pallas import tpu as pltpu


# ----------------------------- small helpers ------------------------------ #

def _round_up(x: int, m: int) -> int:
    return ((x + m - 1) // m) * m


def _round_down(x: int, m: int) -> int:
    return (x // m) * m


def _cdiv(a: int, b: int) -> int:
    return (a + b - 1) // b


def _vmem_capacity_bytes() -> int:
    """Physical VMEM per core; conservative 64 MiB fallback (v7x) if unknown."""
    try:
        return int(getattr(pltpu.get_tpu_info(), "vmem_capacity_bytes",
                           64 << 20))
    except Exception:  # pragma: no cover - conservative fallback
        return 64 << 20


def _vmem_limit(est_bytes: int, cap: int) -> int:
    """2x headroom over the explicit buffer estimate, inside physical VMEM."""
    return int(min(max(32 << 20, 2 * est_bytes), int(cap * 0.9)))


def _pick_block_rows(d_pad: int, cap: int) -> int:
    """Largest Gram tile whose double-buffered bf16 operand streams plus the
    f32 Gram tile stay well inside the (generation-dependent) VMEM budget:
    512/1024 rows on v5e/v6e's 128 MiB, capped on v7x's 64 MiB."""
    best = 128
    for cand in (256, 512, 1024):
        per_buf = cand * d_pad * 2            # one (cand, D_pad) bf16 buffer
        gram = cand * cand * 4                # f32 Gram tile (internal)
        if per_buf <= (4 << 20) and 4 * per_buf + 2 * gram <= int(cap * 0.35):
            best = cand
    return best


# -------------------------------- kernels --------------------------------- #

def _normalize_kernel(f_ref, o_ref, *, b_valid: int):
    """Row-wise L2 normalization: (TB, D) raw -> (TB, D_pad) bf16, padding
    rows (>= b_valid) and padding lanes written as exact zeros."""
    r = pl.program_id(0)
    tb, d_in = f_ref.shape
    d_out = o_ref.shape[1]

    f = f_ref[...].astype(jnp.float32)
    # Rows at/after b_valid are padding (or garbage from a partial edge
    # block); select them to zero BEFORE normalizing so they stay exactly 0.
    row_ids = r * tb + lax.broadcasted_iota(jnp.int32, (tb, 1), 0)
    f = jnp.where(row_ids < b_valid, f, 0.0)

    ssq = jnp.sum(f * f, axis=1, keepdims=True)
    # rsqrt(max(ssq, eps^2)) == 1 / max(||f||, eps) with eps = 1e-12 (EUP op).
    fn = (f * lax.rsqrt(jnp.maximum(ssq, 1e-24))).astype(o_ref.dtype)

    if d_in == d_out:
        o_ref[...] = fn
    else:
        # Zero the lane padding once, then write the valid lanes.
        o_ref[...] = jnp.zeros_like(o_ref)
        o_ref[:, :d_in] = fn


def _opl_gram_kernel(i_arr_ref, j_arr_ref, rowf_ref, colf_ref, labr_ref,
                     labc_ref, out_ref):
    """One upper-triangle Gram tile (i, j), j >= i.

    Partials accumulate in the (8,128) output block (VMEM-resident across the
    whole 1-D grid, written back to HBM once).  Lane layout:
      0: diag-tile sum(dot)      1: diag-tile sum(dot | same label)
      2: off-diag sum(dot)       3: off-diag sum(dot | same label)
      4: Gram trace (exact, diagonal tiles only)
    """
    t = pl.program_id(0)
    i = i_arr_ref[t]
    j = j_arr_ref[t]
    is_diag = i == j

    @pl.when(t == 0)
    def _init():
        out_ref[...] = jnp.zeros_like(out_ref)

    # (TM, TN) Gram tile on the MXU: bf16 x bf16 -> f32, contraction over the
    # lane dim of both operands (no explicit transpose).
    dot = lax.dot_general(rowf_ref[...], colf_ref[...],
                          (((1,), (1,)), ((), ())),
                          preferred_element_type=jnp.float32)

    same = labr_ref[...] == labc_ref[...]          # (TM, TN) same-label mask

    # Only two full-tile reductions; pair counts live in the wrapper and the
    # padded (all-zero) feature rows contribute nothing to either sum.
    total_s = jnp.sum(dot)
    same_s = jnp.sum(jnp.where(same, dot, 0.0))

    lane = lax.broadcasted_iota(jnp.int32, out_ref.shape, 1)

    @pl.when(is_diag)
    def _diag_tile():
        tm, tn = dot.shape
        eye = (lax.broadcasted_iota(jnp.int32, (tm, tn), 0)
               == lax.broadcasted_iota(jnp.int32, (tm, tn), 1))
        diag_s = jnp.sum(jnp.where(eye, dot, 0.0))
        out_ref[...] += (jnp.where(lane == 0, total_s, 0.0)
                         + jnp.where(lane == 1, same_s, 0.0)
                         + jnp.where(lane == 4, diag_s, 0.0))

    @pl.when(jnp.logical_not(is_diag))
    def _upper_tile():
        out_ref[...] += (jnp.where(lane == 2, total_s, 0.0)
                         + jnp.where(lane == 3, same_s, 0.0))


def _opl_fused_kernel(f_ref, labr_ref, labc_ref, out_ref):
    """Small-problem path: normalize + Gram + reductions in one kernel (f32).
    Writes lanes 0 (total), 1 (same-label), 4 (trace); lanes 2/3 stay 0."""
    f = f_ref[...].astype(jnp.float32)
    ssq = jnp.sum(f * f, axis=1, keepdims=True)
    fn = f * lax.rsqrt(jnp.maximum(ssq, 1e-24))

    dot = lax.dot_general(fn, fn, (((1,), (1,)), ((), ())),
                          preferred_element_type=jnp.float32)
    same = labr_ref[...] == labc_ref[...]
    b = dot.shape[0]
    eye = (lax.broadcasted_iota(jnp.int32, (b, b), 0)
           == lax.broadcasted_iota(jnp.int32, (b, b), 1))

    total_s = jnp.sum(dot)
    same_s = jnp.sum(jnp.where(same, dot, 0.0))
    diag_s = jnp.sum(jnp.where(eye, dot, 0.0))

    lane = lax.broadcasted_iota(jnp.int32, out_ref.shape, 1)
    out_ref[...] = (jnp.where(lane == 0, total_s, 0.0)
                    + jnp.where(lane == 1, same_s, 0.0)
                    + jnp.where(lane == 4, diag_s, 0.0))


# ------------------------------ host wrappers ------------------------------ #

def _opl_tiled_partials(features, labels_i32, block_rows, cap):
    """Normalize + upper-triangle tiled Gram; returns the (8,128) partials."""
    B, D = features.shape
    D_pad = _round_up(D, 128)

    if block_rows is None:
        block_rows = _pick_block_rows(D_pad, cap)
    block_rows = int(block_rows)

    if B <= block_rows:
        tm = _round_up(B, 8)                    # single Gram tile
        tb1 = max(8, _round_down(B, 8))         # kernel-1 row block
        grow_tb1 = False
    else:
        tm = max(128, _round_down(block_rows, 128))  # keep (1, tm) lane-legal
        tb1 = tm
        grow_tb1 = True
    B_pad = _round_up(B, tm)
    num_i = B_pad // tm

    # ---- Kernel 1: row-wise L2 normalize -> (B_pad, D_pad) bf16. ----
    # Bandwidth-bound: grow its row block (a multiple of tm, never past the
    # real row count) up to a modest VMEM budget, independently of tm.
    row_bytes = D * features.dtype.itemsize + D_pad * 2
    if grow_tb1:
        budget1 = min(24 << 20, cap // 4)
        while (tb1 * 2 <= B_pad and tb1 * 2 <= B and tb1 * 2 <= 2048
               and 2 * (tb1 * 2) * row_bytes <= budget1):
            tb1 *= 2
    grid1 = _cdiv(B_pad, tb1)

    fn = pl.pallas_call(
        functools.partial(_normalize_kernel, b_valid=B),
        out_shape=jax.ShapeDtypeStruct((B_pad, D_pad), jnp.bfloat16),
        grid=(grid1,),
        in_specs=[pl.BlockSpec((tb1, D), lambda r: (r, 0))],
        out_specs=pl.BlockSpec((tb1, D_pad), lambda r: (r, 0)),
        compiler_params=pltpu.CompilerParams(
            dimension_semantics=("parallel",),
            vmem_limit_bytes=_vmem_limit(2 * tb1 * row_bytes, cap)),
    )(features)

    # ---- Kernel 2: upper-triangle tiled Gram + two masked reductions. ----
    lab = jnp.pad(labels_i32, (0, B_pad - B), constant_values=-1)
    lab_col = lab.reshape(B_pad, 1)   # row-block labels (broadcast over lanes)
    lab_row = lab.reshape(1, B_pad)   # col-block labels (broadcast over rows)

    pairs = [(i, j) for i in range(num_i) for j in range(i, num_i)]
    npairs = len(pairs)
    i_arr = jnp.asarray([p[0] for p in pairs], dtype=jnp.int32)
    j_arr = jnp.asarray([p[1] for p in pairs], dtype=jnp.int32)

    est2 = 4 * tm * D_pad * 2 + 2 * tm * tm * 4
    partials = pl.pallas_call(
        _opl_gram_kernel,
        out_shape=jax.ShapeDtypeStruct((8, 128), jnp.float32),
        grid_spec=pltpu.PrefetchScalarGridSpec(
            num_scalar_prefetch=2,
            grid=(npairs,),
            in_specs=[
                pl.BlockSpec((tm, D_pad), lambda t, ia, ja: (ia[t], 0)),
                pl.BlockSpec((tm, D_pad), lambda t, ia, ja: (ja[t], 0)),
                pl.BlockSpec((tm, 1), lambda t, ia, ja: (ia[t], 0)),
                pl.BlockSpec((1, tm), lambda t, ia, ja: (0, ja[t])),
            ],
            out_specs=pl.BlockSpec((8, 128), lambda t, ia, ja: (0, 0)),
        ),
        compiler_params=pltpu.CompilerParams(
            # The triangle walk makes the whole grid one accumulation axis
            # (so no "parallel" axis for v7x megacore); the ~2x flop + col-DMA
            # saving from Gram symmetry is worth more for this kernel.
            dimension_semantics=("arbitrary",),
            vmem_limit_bytes=_vmem_limit(est2, cap)),
        cost_estimate=pl.CostEstimate(
            flops=2 * npairs * tm * tm * D_pad,
            transcendentals=0,
            bytes_accessed=(npairs + num_i) * tm * D_pad * 2 + 8 * 128 * 4),
    )(i_arr, j_arr, fn, fn, lab_col, lab_row)
    return partials


def orthogonal_projection_loss(features: jax.Array,
                               labels: jax.Array,
                               gamma: float = 0.5,
                               *,
                               block_rows: int | None = None) -> jax.Array:
    """Pallas TPU forward of OrthogonalProjectionLoss.

    features: (B, D) float array.
    labels  : (B,)  integer class labels.
    returns : scalar float32 loss = 1 - pos_mean + gamma * neg_mean.
    """
    B, D = features.shape
    labels_i32 = labels.reshape(-1).astype(jnp.int32)
    cap = _vmem_capacity_bytes()

    use_fused = (B < 8) or (block_rows is None and B <= 512
                            and B * D * 4 <= (4 << 20))
    if use_fused:
        partials = pl.pallas_call(
            _opl_fused_kernel,
            out_shape=jax.ShapeDtypeStruct((8, 128), jnp.float32),
            grid=(1,),
            in_specs=[pl.BlockSpec((B, D), lambda i: (0, 0)),
                      pl.BlockSpec((B, 1), lambda i: (0, 0)),
                      pl.BlockSpec((1, B), lambda i: (0, 0))],
            out_specs=pl.BlockSpec((8, 128), lambda i: (0, 0)),
            compiler_params=pltpu.CompilerParams(
                dimension_semantics=("arbitrary",)),
        )(features, labels_i32.reshape(B, 1), labels_i32.reshape(1, B))
    else:
        partials = _opl_tiled_partials(features, labels_i32, block_rows, cap)

    # ---- tiny scalar combine (wrapper) ----
    p = partials[0].astype(jnp.float32)       # (128,) lane vector
    total_s = p[0] + 2.0 * p[2]               # off-diag tiles counted twice
    same_s = p[1] + 2.0 * p[3]
    diag_s = p[4]                             # exact trace of the Gram

    # Pair counts depend only on the real (unpadded) labels.
    same_cnt = jnp.sum(
        (labels_i32[:, None] == labels_i32[None, :]).astype(jnp.float32))
    pos_cnt = same_cnt - float(B)             # same-label pairs, diag excluded
    neg_cnt = float(B * B) - same_cnt

    pos_mean = (same_s - diag_s) / (pos_cnt + 1e-6)
    neg_mean = (total_s - same_s) / (neg_cnt + 1e-6)
    return jnp.float32(1.0) - pos_mean + jnp.float32(gamma) * neg_mean


# ------------------------------- reference -------------------------------- #

def _reference(features, labels, gamma=0.5):
    """Pure-JAX f32 reference mirroring the PyTorch forward."""
    f = features / jnp.maximum(
        jnp.linalg.norm(features, axis=1, keepdims=True), 1e-12)
    lab = labels.reshape(-1, 1)
    mask = lab == lab.T
    eye = jnp.eye(mask.shape[0], dtype=bool)
    mask_pos = jnp.where(mask & (~eye), 1.0, 0.0)
    mask_neg = jnp.where(~mask, 1.0, 0.0)
    dot = f @ f.T
    pos = jnp.sum(mask_pos * dot) / (jnp.sum(mask_pos) + 1e-6)
    neg = jnp.sum(mask_neg * dot) / (jnp.sum(mask_neg) + 1e-6)
    return 1.0 - pos + gamma * neg


if __name__ == "__main__":
    key = jax.random.PRNGKey(0)
    kf, kl, kf2, kl2 = jax.random.split(key, 4)

    # Small shape (batch=8, feature dim=32): fused single-kernel path.
    B, D = 8, 32
    features = jax.random.normal(kf, (B, D), dtype=jnp.float32)
    labels = jax.random.randint(kl, (B,), 0, 4, dtype=jnp.int32)

    loss = jax.block_until_ready(
        orthogonal_projection_loss(features, labels, gamma=0.5))
    ref = _reference(features, labels, gamma=0.5)
    assert jnp.allclose(loss, ref, rtol=1e-2, atol=1e-2), (loss, ref)

    # Small multi-tile shape: exercises the normalize kernel and the
    # upper-triangle tiled Gram kernel (3x3 tile grid -> 6 tile pairs).
    B2, D2 = 300, 72
    features2 = jax.random.normal(kf2, (B2, D2), dtype=jnp.float32)
    labels2 = jax.random.randint(kl2, (B2,), 0, 10, dtype=jnp.int32)

    loss2 = jax.block_until_ready(
        orthogonal_projection_loss(features2, labels2, gamma=0.5,
                                   block_rows=128))
    ref2 = _reference(features2, labels2, gamma=0.5)
    # bf16 normalized features on the tiled path => loosened tolerance.
    assert jnp.allclose(loss2, ref2, rtol=2e-2, atol=2e-2), (loss2, ref2)

    print("KERNEL_OK")
</pallas_src>

<mosaic_0001>
module attributes {stable_mosaic.version = 11 : i64} {
  func.func @_opl_fused_kernel(%arg0: i32, %arg1: memref<8x32xf32, #tpu.memory_space<vmem>>, %arg2: memref<8x1xi32, #tpu.memory_space<vmem>>, %arg3: memref<1x8xi32, #tpu.memory_space<vmem>>, %arg4: memref<8x128xf32, #tpu.memory_space<vmem>>) attributes {dimension_semantics = [#tpu.dimension_semantics<arbitrary>], iteration_bounds = array<i64: 1>, scalar_prefetch = 0 : i64, scratch_operands = 0 : i64, tpu.core_type = #tpu.core_type<tc>, window_params = [{pipeline_mode = #tpu.pipeline_mode<synchronous>, transform_indices = @transform_0, window_bounds = array<i64: 8, 32>}, {pipeline_mode = #tpu.pipeline_mode<synchronous>, transform_indices = @transform_1, window_bounds = array<i64: 8, 1>}, {pipeline_mode = #tpu.pipeline_mode<synchronous>, transform_indices = @transform_2, window_bounds = array<i64: 1, 8>}, {pipeline_mode = #tpu.pipeline_mode<synchronous>, transform_indices = @transform_3, window_bounds = array<i64: 8, 128>}]} {
    %c0 = arith.constant 0 : index
    %c0_0 = arith.constant 0 : index
    %0 = vector.load %arg1[%c0, %c0_0] : memref<8x32xf32, #tpu.memory_space<vmem>>, vector<8x32xf32>
    %1 = arith.mulf %0, %0 : vector<8x32xf32>
    %cst = arith.constant dense<0.000000e+00> : vector<8xf32>
    %2 = vector.multi_reduction <add>, %1, %cst [1] : vector<8x32xf32> to vector<8xf32>
    %3 = vector.shape_cast %2 : vector<8xf32> to vector<8x1xf32>
    %cst_1 = arith.constant 1.000000e-24 : f32
    %4 = vector.broadcast %cst_1 : f32 to vector<8x1xf32>
    %5 = arith.maximumf %3, %4 : vector<8x1xf32>
    %6 = math.rsqrt %5 : vector<8x1xf32>
    %7 = vector.broadcast %6 : vector<8x1xf32> to vector<8x32xf32>
    %8 = arith.mulf %0, %7 : vector<8x32xf32>
    %cst_2 = arith.constant dense<0.000000e+00> : vector<8x8xf32>
    %9 = tpu.matmul %8, %8, %cst_2 {dimension_numbers = #tpu.dot_dimension_numbers<[1], [1], [0], [0], [0, 0, 1, 0], [], []>} : vector<8x32xf32>, vector<8x32xf32>, vector<8x8xf32> -> vector<8x8xf32>
    %c0_3 = arith.constant 0 : index
    %c0_4 = arith.constant 0 : index
    %10 = vector.load %arg2[%c0_3, %c0_4] : memref<8x1xi32, #tpu.memory_space<vmem>>, vector<8x1xi32>
    %c0_5 = arith.constant 0 : index
    %c0_6 = arith.constant 0 : index
    %11 = vector.load %arg3[%c0_5, %c0_6] : memref<1x8xi32, #tpu.memory_space<vmem>>, vector<1x8xi32>
    %12 = vector.broadcast %10 : vector<8x1xi32> to vector<8x8xi32>
    %13 = vector.broadcast %11 : vector<1x8xi32> to vector<8x8xi32>
    %14 = arith.cmpi eq, %12, %13 : vector<8x8xi32>
    %15 = tpu.iota {dimensions = array<i32: 0>} : vector<8x8xi32>
    %16 = tpu.iota {dimensions = array<i32: 1>} : vector<8x8xi32>
    %17 = arith.cmpi eq, %15, %16 : vector<8x8xi32>
    %18 = vector.shape_cast %9 : vector<8x8xf32> to vector<1x8x8xf32>
    %cst_7 = arith.constant dense<0.000000e+00> : vector<1xf32>
    %19 = vector.multi_reduction <add>, %18, %cst_7 [1, 2] : vector<1x8x8xf32> to vector<1xf32>
    %20 = vector.shape_cast %19 : vector<1xf32> to vector<1x1x1xf32>
    %21 = vector.extract %20[0, 0, 0] : f32 from vector<1x1x1xf32>
    %cst_8 = arith.constant 0.000000e+00 : f32
    %22 = vector.broadcast %cst_8 : f32 to vector<8x8xf32>
    %23 = arith.select %14, %9, %22 : vector<8x8xi1>, vector<8x8xf32>
    %24 = vector.shape_cast %23 : vector<8x8xf32> to vector<1x8x8xf32>
    %cst_9 = arith.constant dense<0.000000e+00> : vector<1xf32>
    %25 = vector.multi_reduction <add>, %24, %cst_9 [1, 2] : vector<1x8x8xf32> to vector<1xf32>
    %26 = vector.shape_cast %25 : vector<1xf32> to vector<1x1x1xf32>
    %27 = vector.extract %26[0, 0, 0] : f32 from vector<1x1x1xf32>
    %cst_10 = arith.constant 0.000000e+00 : f32
    %28 = vector.broadcast %cst_10 : f32 to vector<8x8xf32>
    %29 = arith.select %17, %9, %28 : vector<8x8xi1>, vector<8x8xf32>
    %30 = vector.shape_cast %29 : vector<8x8xf32> to vector<1x8x8xf32>
    %cst_11 = arith.constant dense<0.000000e+00> : vector<1xf32>
    %31 = vector.multi_reduction <add>, %30, %cst_11 [1, 2] : vector<1x8x8xf32> to vector<1xf32>
    %32 = vector.shape_cast %31 : vector<1xf32> to vector<1x1x1xf32>
    %33 = vector.extract %32[0, 0, 0] : f32 from vector<1x1x1xf32>
    %34 = tpu.iota {dimensions = array<i32: 1>} : vector<8x128xi32>
    %c0_i32 = arith.constant 0 : i32
    %35 = vector.broadcast %c0_i32 : i32 to vector<8x128xi32>
    %36 = arith.cmpi eq, %34, %35 : vector<8x128xi32>
    %cst_12 = arith.constant 0.000000e+00 : f32
    %37 = vector.broadcast %21 : f32 to vector<8x128xf32>
    %38 = vector.broadcast %cst_12 : f32 to vector<8x128xf32>
    %39 = arith.select %36, %37, %38 : vector<8x128xi1>, vector<8x128xf32>
    %c1_i32 = arith.constant 1 : i32
    %40 = vector.broadcast %c1_i32 : i32 to vector<8x128xi32>
    %41 = arith.cmpi eq, %34, %40 : vector<8x128xi32>
    %cst_13 = arith.constant 0.000000e+00 : f32
    %42 = vector.broadcast %27 : f32 to vector<8x128xf32>
    %43 = vector.broadcast %cst_13 : f32 to vector<8x128xf32>
    %44 = arith.select %41, %42, %43 : vector<8x128xi1>, vector<8x128xf32>
    %45 = arith.addf %39, %44 : vector<8x128xf32>
    %c4_i32 = arith.constant 4 : i32
    %46 = vector.broadcast %c4_i32 : i32 to vector<8x128xi32>
    %47 = arith.cmpi eq, %34, %46 : vector<8x128xi32>
    %cst_14 = arith.constant 0.000000e+00 : f32
    %48 = vector.broadcast %33 : f32 to vector<8x128xf32>
    %49 = vector.broadcast %cst_14 : f32 to vector<8x128xf32>
    %50 = arith.select %47, %48, %49 : vector<8x128xi1>, vector<8x128xf32>
    %51 = arith.addf %45, %50 : vector<8x128xf32>
    %c0_15 = arith.constant 0 : index
    %c0_16 = arith.constant 0 : index
    %52 = vector.load %arg4[%c0_15, %c0_16] : memref<8x128xf32, #tpu.memory_space<vmem>>, vector<8x128xf32>
    tpu.vector_store %arg4[%c0_15, %c0_16], %51 {strides = array<i32>} : memref<8x128xf32, #tpu.memory_space<vmem>>, vector<8x128xf32>,
    return
  }
  func.func @transform_0(%arg0: i32) -> (i32, i32) {
    %c0_i32 = arith.constant 0 : i32
    %c0_i32_0 = arith.constant 0 : i32
    %c0_i32_1 = arith.constant 0 : i32
    return %c0_i32, %c0_i32_0 : i32, i32
  }
  func.func @transform_1(%arg0: i32) -> (i32, i32) {
    %c0_i32 = arith.constant 0 : i32
    %c0_i32_0 = arith.constant 0 : i32
    %c0_i32_1 = arith.constant 0 : i32
    return %c0_i32, %c0_i32_0 : i32, i32
  }
  func.func @transform_2(%arg0: i32) -> (i32, i32) {
    %c0_i32 = arith.constant 0 : i32
    %c0_i32_0 = arith.constant 0 : i32
    %c0_i32_1 = arith.constant 0 : i32
    return %c0_i32, %c0_i32_0 : i32, i32
  }
  func.func @transform_3(%arg0: i32) -> (i32, i32) {
    %c0_i32 = arith.constant 0 : i32
    %c0_i32_0 = arith.constant 0 : i32
    %c0_i32_1 = arith.constant 0 : i32
    return %c0_i32, %c0_i32_0 : i32, i32
  }
}

</mosaic_0001>

<llo_original>
// kernel: tpu_custom_call.1
$region0: #{tpu_custom_call.1}
  #allocation0 [shape = 'u32[]', space=smem, size = 0x4, offset = 0x4, fixed_abs, tag = 'smem constant byte address 0x4 - core index']
  #allocation1 [shape = 'u32[144,128]{1,0:T(1,128)}', space=vmem, size = 0x12000, scoped, tag = 'internal scratch']
  %s0 = inlined_call_operand.vmem [shape: f32[8,32], index: 0, kind: input, shape index: {}]
  %s1 = inlined_call_operand.vmem [shape: s32[8,1], index: 1, kind: input, shape index: {}]
  %s2 = inlined_call_operand.vmem [shape: s32[1,8], index: 2, kind: input, shape index: {}]
  %s3 = inlined_call_operand.hbm [shape: f32[8,128], index: 3, kind: output, shape index: {}]
  %s4 = sld [smem:[#allocation0]]
  $region22: #{tpu_custom_call.1} parent=0
    _
  %s6 = ssub.s32 1, %s4
  %s7 = scalar_select 0, %s6, %s4
  $region1: #{tpu_custom_call.1} parent=0
    #allocation2 [shape = 'u8[4096]{0}', space=vmem, size = 0x1000, scoped, tag = 'output window, operand 0, single buffered']
    #allocation3 [shape = 's32[1]{0}', space=sflag, size = 0x4, scoped, tag = 'scoped memory for tpu_custom_call.1']
    %8 = vsyncpa [#allocation3], 0
    // Predicated region
    $region2: #{tpu_custom_call.1} parent=1 // pred_check
      _
    $region3: #{tpu_custom_call.1} parent=1 // pred_check_branch
      %10 = sbr.rel (0) target = $region5
    $region4: #{tpu_custom_call.1} parent=1 // pred_region
      _
    $region5: #{tpu_custom_call.1} parent=1 // pred_fallthru
      _
    // Predicated region
    $region6: #{tpu_custom_call.1} parent=1 // pred_check
      _
    $region7: #{tpu_custom_call.1} parent=1 // pred_check_branch
      %12 = sbr.rel (0) target = $region9
    $region8: #{tpu_custom_call.1} parent=1 // pred_region
      _
    $region9: #{tpu_custom_call.1} parent=1 // pred_fallthru
      _
    // Predicated region
    $region10: #{tpu_custom_call.1} parent=1 // pred_check
      _
    $region11: #{tpu_custom_call.1} parent=1 // pred_check_branch
      %14 = sbr.rel (0) target = $region13
    $region12: #{tpu_custom_call.1} parent=1 // pred_region
      _
    $region13: #{tpu_custom_call.1} parent=1 // pred_fallthru
      _
    %v15 = vld [vmem:[%s0] sm:$0xff]
    %v16 = vmul.f32 %v15, %v15
    %vm17 = vcmask 261120
    %v18 = vsel %vm17, %v16, 0.0
    %19 = vadd.xlane.f32.xlu0 %v18
    %v20 = vpop.xlane.xlu0 %19
    %v21 = vmax.f32 %v20, 1e-24
    %v22 = vrsqrt.pop %v21
    %v23 = vmul.f32 %v15, %v22
    %v25 = vsel %vm17, %v23, 0
    %27 = vmatprep.subr.mxu0 0.0
    %28 = vmatpush1.xpose.msra.mxu0 %v25
    %29 = vmatprep.subr.mxu0 0.0
    %30 = vmatpush1.xpose.msra.mxu0 0.0
    %31 = vmatprep.subr.mxu0 0.0
    %32 = vmatpush1.xpose.msra.mxu0 0.0
    %33 = vmatprep.subr.mxu0 0.0
    %34 = vmatpush1.xpose.msra.mxu0 0.0
    %35 = vmatprep.subr.mxu0 0.0
    %36 = vmatpush1.xpose.msra.mxu0 0.0
    %37 = vmatprep.subr.mxu0 0.0
    %38 = vmatpush1.xpose.msra.mxu0 0.0
    %39 = vmatprep.subr.mxu0 0.0
    %40 = vmatpush1.xpose.msra.mxu0 0.0
    %41 = vmatprep.subr.mxu0 0.0
    %42 = vmatpush1.xpose.msra.mxu0 0.0
    %43 = vmatprep.subr.mxu0 0.0
    %44 = vmatpush1.xpose.msra.mxu0 0.0
    %45 = vmatprep.subr.mxu0 0.0
    %46 = vmatpush1.xpose.msra.mxu0 0.0
    %47 = vmatprep.subr.mxu0 0.0
    %48 = vmatpush1.xpose.msra.mxu0 0.0
    %49 = vmatprep.subr.mxu0 0.0
    %50 = vmatpush1.xpose.msra.mxu0 0.0
    %51 = vmatprep.subr.mxu0 0.0
    %52 = vmatpush1.xpose.msra.mxu0 0.0
    %53 = vmatprep.subr.mxu0 0.0
    %54 = vmatpush1.xpose.msra.mxu0 0.0
    %55 = vmatprep.subr.mxu0 0.0
    %56 = vmatpush1.xpose.msra.mxu0 0.0
    %57 = vmatprep.subr.mxu0 0.0
    %58 = vmatpush1.xpose.msra.mxu0 0.0
    %59 = vmatprep.subr.mxu0 0.0
    %60 = vmatpush1.xpose.msra.mxu0 0.0
    %61 = vmatprep.subr.mxu0 0.0
    %62 = vmatpush1.xpose.msra.mxu0 0.0
    %63 = vmatprep.subr.mxu0 0.0
    %64 = vmatpush1.xpose.msra.mxu0 0.0
    %65 = vmatprep.subr.mxu0 0.0
    %66 = vmatpush1.xpose.msra.mxu0 0.0
    %67 = vmatprep.subr.mxu0 0.0
    %68 = vmatpush1.xpose.msra.mxu0 0.0
    %69 = vmatprep.subr.mxu0 0.0
    %70 = vmatpush1.xpose.msra.mxu0 0.0
    %71 = vmatprep.subr.mxu0 0.0
    %72 = vmatpush1.xpose.msra.mxu0 0.0
    %73 = vmatprep.subr.mxu0 0.0
    %74 = vmatpush1.xpose.msra.mxu0 0.0
    %75 = vmatprep.subr.mxu0 0.0
    %76 = vmatpush1.xpose.msra.mxu0 0.0
    %77 = vmatprep.subr.mxu0 0.0
    %78 = vmatpush1.xpose.msra.mxu0 0.0
    %79 = vmatprep.subr.mxu0 0.0
    %80 = vmatpush1.xpose.msra.mxu0 0.0
    %81 = vmatprep.subr.mxu0 0.0
    %82 = vmatpush1.xpose.msra.mxu0 0.0
    %83 = vmatprep.subr.mxu0 0.0
    %84 = vmatpush1.xpose.msra.mxu0 0.0
    %85 = vmatprep.subr.mxu0 0.0
    %86 = vmatpush1.xpose.msra.mxu0 0.0
    %87 = vmatprep.subr.mxu0 0.0
    %88 = vmatpush1.xpose.msra.mxu0 0.0
    %89 = vmatprep.subr.mxu0 0.0
    %90 = vmatpush1.xpose.msra.mxu0 0.0
    %91 = vmatprep.mubr.f32.mxu0 0.0
    %92 = vmatmul.mubr.f32.gmra.mrb[0].mxu0 %v25
    %v93 = vpop.f32.mrb[0].mxu0
    %v94 = vadd.f32 0.0, %v93
    %v95 = vpop.f32.mrb[0].mxu0
    %96 = vdwg.mxu0
    %v97 = vld [vmem:[%s1] sm:$0xff]
    %v98 = vld [vmem:[%s2] sm:$0x1]
    %99 = vset.pattern.permute.xlu0 0
    %100 = vperm.xlu0 %99, %v97
    %v101 = vpop.permute.xlu0 %100
    %v102 = vlaneseq
    %v103 = vshrl.u32 %v102, 7
    %v104 = vsub.s32 0, %v103
    %v105 = vrot.slane %v98, %v104
    %vm106 = vcmp.eq.s32.totalorder %v101, %v105
    %v107 = vlaneseq
    %v108 = vshrl.u32 %v107, 7
    %v109 = vlaneseq
    %v110 = vand.u32 %v109, 127
    %vm111 = vcmp.eq.s32.totalorder %v108, %v110
    %vm112 = vcmask 64512
    %v113 = vsel %vm112, %v94, 0.0
    %114 = vadd.xlane.f32.xlu0 %v113
    %v115 = vpop.xlane.xlu0 %114
    %v116 = vrot.slane %v115, 4
    %v117 = vadd.f32 %v115, %v116
    %v118 = vrot.slane %v117, 2
    %v119 = vadd.f32 %v117, %v118
    %v120 = vrot.slane %v119, 1
    %v121 = vadd.f32 %v119, %v120
    %s122 = vtos %v121
    %v123 = vsel %vm106, %v94, 0.0
    %v124 = vsel %vm112, %v123, 0.0
    %125 = vadd.xlane.f32.xlu0 %v124
    %v126 = vpop.xlane.xlu0 %125
    %v127 = vrot.slane %v126, 4
    %v128 = vadd.f32 %v126, %v127
    %v129 = vrot.slane %v128, 2
    %v130 = vadd.f32 %v128, %v129
    %v131 = vrot.slane %v130, 1
    %v132 = vadd.f32 %v130, %v131
    %s133 = vtos %v132
    %v134 = vsel %vm111, %v94, 0.0
    %v135 = vsel %vm112, %v134, 0.0
    %136 = vadd.xlane.f32.xlu0 %v135
    %v137 = vpop.xlane.xlu0 %136
    %v138 = vrot.slane %v137, 4
    %v139 = vadd.f32 %v137, %v138
    %v140 = vrot.slane %v139, 2
    %v141 = vadd.f32 %v139, %v140
    %v142 = vrot.slane %v141, 1
    %v143 = vadd.f32 %v141, %v142
    %s144 = vtos %v143
    %vm145 = vcmp.eq.s32.totalorder %v110, 0
    %v146 = vstv %s122
    %v147 = vsel %vm145, %v146, 0.0
    %vm148 = vcmp.eq.s32.totalorder %v110, 1
    %v149 = vstv %s133
    %v150 = vsel %vm148, %v149, 0.0
    %v151 = vadd.f32 %v147, %v150
    %vm152 = vcmp.eq.s32.totalorder %v110, 4
    %v153 = vstv %s144
    %v154 = vsel %vm152, %v153, 0.0
    %v155 = vadd.f32 %v151, %v154
    %156 = vst [vmem:[#allocation2] sm:$0xff] %v155
    // Predicated region
    $region14: #{tpu_custom_call.1} parent=1 // pred_check
      _
    $region15: #{tpu_custom_call.1} parent=1 // pred_check_branch
      %158 = sbr.rel (0) target = $region17
    $region16: #{tpu_custom_call.1} parent=1 // pred_region
      %s160 = ssub.s32 128, 128
      %161 = vsyncadd [#allocation3], %s160
      %s163 = sshll.u32 [#allocation2], 4
      %s164 = int_to_ptr.vmem [resolvable:$true] %s163
      %166 = dma.vmem_to_hbm [thread:$0]  %s164, 128, %s3, [#allocation3]
    $region17: #{tpu_custom_call.1} parent=1 // pred_fallthru
      _
    // Predicated region
    $region18: #{tpu_custom_call.1} parent=1 // pred_check
      _
    $region19: #{tpu_custom_call.1} parent=1 // pred_check_branch
      %168 = sbr.rel (0) target = $region21
    $region20: #{tpu_custom_call.1} parent=1 // pred_region
      %169 = dma.done [#allocation3], 128
    $region21: #{tpu_custom_call.1} parent=1 // pred_fallthru
      _
    %170 = vsyncpa [#allocation3], 1

</llo_original>
